<compile_context>
chip_gen: v5e
topology: v5e:2x2
jax: 0.10.0
libtpu: 0.0.40
codegen_flags: <defaults>
</compile_context>

<pallas_src>
import jax
import jax.numpy as jnp
from jax.experimental import pallas as pl
from jax.experimental.pallas import tpu as pltpu


def _passthrough_kernel(x_ref, o_ref):
    # forward(x) -> x.  With the output aliased to the input this is just a
    # cheap VMEM touch / in-place rewrite of the same bytes.
    o_ref[...] = x_ref[...]


def _identity_pallas(x):
    return pl.pallas_call(
        _passthrough_kernel,
        out_shape=jax.ShapeDtypeStruct(x.shape, x.dtype),
        # Gridless call: whole array resident in VMEM, no pipeline machinery.
        in_specs=[pl.BlockSpec(memory_space=pltpu.MemorySpace.VMEM)],
        out_specs=pl.BlockSpec(memory_space=pltpu.MemorySpace.VMEM),
        # Output buffer aliases the input buffer (PyTorch returns x itself).
        input_output_aliases={0: 0},
    )(x)


# Donate x at the jit boundary so XLA honors the input/output alias instead of
# materializing a fresh output buffer (which would re-add a full HBM copy).
_identity_pallas_jit = jax.jit(_identity_pallas, donate_argnums=0)


def parameter_list_forward(x, weights):
    """Mirrors ParameterListModel.forward: `_ = self.weights; return x`."""
    _ = weights  # parameters are module state only; never enter the kernel
    return _identity_pallas_jit(x)


def init_parameter_list(key):
    """Deterministic stand-in for torch.Tensor(100, 300).split([100, 200], dim=1)."""
    base = jax.random.normal(key, (100, 300), dtype=jnp.float32)
    return [base[:, :100], base[:, 100:300]]


if __name__ == "__main__":
    key = jax.random.PRNGKey(0)
    k_w, k_x = jax.random.split(key)

    # Module state: ParameterList of shapes (100, 100) and (100, 200).
    weights = init_parameter_list(k_w)

    # Small, lane-dense example input (forward is a shape-polymorphic identity).
    x = jax.random.normal(k_x, (8, 128), dtype=jnp.float32)
    x_expected = jnp.array(x)  # keep an undonated copy for the correctness check

    out = parameter_list_forward(x, weights)
    out = jax.block_until_ready(out)

    assert out.shape == x_expected.shape
    assert out.dtype == x_expected.dtype
    assert bool(jnp.array_equal(out, x_expected))

    print("KERNEL_OK")
</pallas_src>

<mosaic_0001>
module attributes {stable_mosaic.version = 11 : i64} {
  func.func @_passthrough_kernel(%arg0: memref<8x128xf32, #tpu.memory_space<vmem>>, %arg1: memref<8x128xf32, #tpu.memory_space<vmem>>) attributes {dimension_semantics = [], scalar_prefetch = 0 : i64, scratch_operands = 0 : i64, tpu.core_type = #tpu.core_type<tc>} {
    %c0 = arith.constant 0 : index
    %c0_0 = arith.constant 0 : index
    %0 = vector.load %arg0[%c0, %c0_0] : memref<8x128xf32, #tpu.memory_space<vmem>>, vector<8x128xf32>
    %c0_1 = arith.constant 0 : index
    %c0_2 = arith.constant 0 : index
    %1 = vector.load %arg1[%c0_1, %c0_2] : memref<8x128xf32, #tpu.memory_space<vmem>>, vector<8x128xf32>
    tpu.vector_store %arg1[%c0_1, %c0_2], %0 {strides = array<i32>} : memref<8x128xf32, #tpu.memory_space<vmem>>, vector<8x128xf32>,
    return
  }
}

</mosaic_0001>

<llo_original>
// kernel: _identity_pallas.1
$region0: #{_identity_pallas.1}
  #allocation0 [shape = 'u32[]', space=smem, size = 0x4, offset = 0x4, fixed_abs, tag = 'smem constant byte address 0x4 - core index']
  #allocation1 [shape = 'u32[72,128]{1,0:T(1,128)}', space=vmem, size = 0x9000, scoped, tag = 'internal scratch']
  %s0 = inlined_call_operand.hbm [shape: f32[8,128], index: 0, kind: input, shape index: {}, may-alias: {0,1}]
  %s1 = inlined_call_operand.hbm [shape: f32[8,128], index: 1, kind: output, shape index: {}, may-alias: {0,1}]
  %s2 = sld [smem:[#allocation0]]
  $region18: #{_identity_pallas.1} parent=0
    _
  %s4 = ssub.s32 1, %s2
  %s5 = scalar_select 0, %s4, %s2
  $region1: #{_identity_pallas.1} parent=0
    #allocation2 [shape = 'u8[4096]{0}', space=vmem, size = 0x1000, scoped, tag = 'input window, operand 0, single buffered']
    #allocation3 [shape = 's32[1]{0}', space=sflag, size = 0x4, scoped, tag = 'scoped memory for _identity_pallas.1']
    #allocation4 [shape = 's32[1]{0}', space=sflag, size = 0x4, scoped, tag = 'scoped memory for _identity_pallas.1']
    #allocation5 [shape = 'u8[4096]{0}', space=vmem, size = 0x1000, scoped, tag = 'output window, operand 0, single buffered']
    %6 = vsyncpa [#allocation3], 0
    %7 = vsyncpa [#allocation4], 0
    // Predicated region
    $region2: #{_identity_pallas.1} parent=1 // pred_check
      _
    $region3: #{_identity_pallas.1} parent=1 // pred_check_branch
      %9 = sbr.rel (0) target = $region5
    $region4: #{_identity_pallas.1} parent=1 // pred_region
      %11 = vsyncadd [#allocation3], 0
      %s13 = sshll.u32 %s0, 4
      %s14 = int_to_ptr.hbm [resolvable:$true] %s13
      %s15 = sshll.u32 [#allocation2], 4
      %s16 = int_to_ptr.vmem [resolvable:$true] %s15
      %18 = dma.hbm_to_vmem [thread:$0]  %s14, 128, %s16, [#allocation3]
    $region5: #{_identity_pallas.1} parent=1 // pred_fallthru
      _
    // Predicated region
    $region6: #{_identity_pallas.1} parent=1 // pred_check
      _
    $region7: #{_identity_pallas.1} parent=1 // pred_check_branch
      %20 = sbr.rel (0) target = $region9
    $region8: #{_identity_pallas.1} parent=1 // pred_region
      %22 = dma.done [#allocation3], 128
    $region9: #{_identity_pallas.1} parent=1 // pred_fallthru
      _
    %v23 = vld [vmem:[#allocation2] sm:$0xff]
    %24 = vst [vmem:[#allocation5] sm:$0xff] %v23
    // Predicated region
    $region10: #{_identity_pallas.1} parent=1 // pred_check
      _
    $region11: #{_identity_pallas.1} parent=1 // pred_check_branch
      %26 = sbr.rel (0) target = $region13
    $region12: #{_identity_pallas.1} parent=1 // pred_region
      %28 = vsyncadd [#allocation4], 0
      %s30 = sshll.u32 [#allocation5], 4
      %s31 = int_to_ptr.vmem [resolvable:$true] %s30
      %s32 = sshll.u32 %s1, 4
      %s33 = int_to_ptr.hbm [resolvable:$true] %s32
      %35 = dma.vmem_to_hbm [thread:$0]  %s31, 128, %s33, [#allocation4]
    $region13: #{_identity_pallas.1} parent=1 // pred_fallthru
      _
    // Predicated region
    $region14: #{_identity_pallas.1} parent=1 // pred_check
      _
    $region15: #{_identity_pallas.1} parent=1 // pred_check_branch
      %37 = sbr.rel (0) target = $region17
    $region16: #{_identity_pallas.1} parent=1 // pred_region
      %39 = dma.done [#allocation4], 128
    $region17: #{_identity_pallas.1} parent=1 // pred_fallthru
      _
    %40 = vsyncpa [#allocation3], 1
    %41 = vsyncpa [#allocation4], 1

</llo_original>
